<compile_context>
chip_gen: v7x
topology: tpu7x:2x2x1
jax: 0.10.0
libtpu: 0.0.40
codegen_flags: <defaults>
</compile_context>

<pallas_src>
import functools
import math

import jax
import jax.numpy as jnp
from jax.experimental import pallas as pl
from jax.experimental.pallas import tpu as pltpu

LANES = 128
_MAX_TILE_ROWS = 8192                 # 8192 rows * 128 lanes * 4 B = 4 MiB (f32)
_VMEM_LIMIT_BYTES = 32 * 1024 * 1024


def _sublane_multiple(dtype) -> int:
    # f32 -> 8, bf16 -> 16, int8/fp8 -> 32 (native sublane packing).
    return max(8, 32 // jnp.dtype(dtype).itemsize)


def _affine_relu_kernel(params_ref, x_ref, o_ref):
    """o = relu(x * scale + shift); compute f32, cast on store."""
    x = x_ref[...].astype(jnp.float32)                     # (1, tile_rows, 128)
    y = jnp.maximum(x * params_ref[0] + params_ref[1], 0.0)
    o_ref[...] = y.astype(o_ref.dtype)


def _affine_relu_scale_kernel(params_ref, factor_ref, x_ref, o_ref):
    """o = relu(x * scale + shift) * factor[batch]."""
    b = pl.program_id(0)
    x = x_ref[...].astype(jnp.float32)                     # (1, tile_rows, 128)
    y = jnp.maximum(x * params_ref[0] + params_ref[1], 0.0)
    o_ref[...] = (y * factor_ref[b]).astype(o_ref.dtype)


def _affine_relu_sum_kernel(params_ref, x_ref, sum_ref, *, n_valid,
                            tiles_per_split, tile_rows, needs_mask):
    """Accumulate per-(batch, split) per-lane partial sums of relu(x*s+b)."""
    c = pl.program_id(1)                                   # split index
    t = pl.program_id(2)                                   # tile within split
    tile_global = c * tiles_per_split + t

    @pl.when(t == 0)
    def _():
        sum_ref[...] = jnp.zeros_like(sum_ref)

    x = x_ref[...].astype(jnp.float32)                     # (1, tile_rows, 128)
    y = jnp.maximum(x * params_ref[0] + params_ref[1], 0.0)

    if not needs_mask:
        sum_ref[...] += jnp.sum(y, axis=1, keepdims=True)  # (1, 1, 128)
        return

    # Index of the first tile that may contain invalid elements (ragged tail,
    # zero padding, or a clamped duplicate tile from the core split).
    n_full = n_valid // (tile_rows * LANES)

    @pl.when(tile_global < n_full)
    def _():
        sum_ref[...] += jnp.sum(y, axis=1, keepdims=True)

    @pl.when(tile_global >= n_full)
    def _():
        row = jax.lax.broadcasted_iota(jnp.int32, y.shape, 1)
        lane = jax.lax.broadcasted_iota(jnp.int32, y.shape, 2)
        flat = (tile_global * tile_rows + row) * LANES + lane
        ym = jnp.where(flat < n_valid, y, 0.0)
        sum_ref[...] += jnp.sum(ym, axis=1, keepdims=True)


def multi_scale_processor(density_map, density_scale, density_shift, count=None,
                          *, max_tile_rows=_MAX_TILE_ROWS, donate_input=False):
    """Pallas equivalent of MultiScaleProcessor.forward."""
    orig_shape = density_map.shape
    orig_dtype = density_map.dtype
    batch = orig_shape[0]
    n = int(math.prod(orig_shape[1:]))

    sub = _sublane_multiple(orig_dtype)
    rows = pl.cdiv(n, LANES)
    n_pad = rows * LANES

    # Lane-dense slab (batch, rows, 128).  Free reshape when n % 128 == 0;
    # otherwise a minimal pad to the next multiple of 128 (extra copy).
    x2 = density_map.reshape(batch, n)
    if n_pad != n:
        x2 = jnp.pad(x2, ((0, 0), (0, n_pad - n)))
    x3 = x2.reshape(batch, rows, LANES)

    # Row tile: largest sublane-multiple <= cap that does not exceed `rows`;
    # the ragged last tile is handled by Pallas edge-block masking.
    cap = max(sub, (int(max_tile_rows) // sub) * sub)
    if rows >= sub:
        tile_rows = min(cap, (rows // sub) * sub)
    else:
        tile_rows = rows                                    # block == full dim
    n_tiles = pl.cdiv(rows, tile_rows)

    # Parameters stay f32 in SMEM (fp32 nn.Parameter semantics for bf16 input).
    params = jnp.stack([
        jnp.asarray(density_scale, jnp.float32).reshape(()),
        jnp.asarray(density_shift, jnp.float32).reshape(()),
    ])

    x_spec = pl.BlockSpec((1, tile_rows, LANES), lambda b, t: (b, t, 0))
    smem_spec = pl.BlockSpec(memory_space=pltpu.MemorySpace.SMEM)

    if count is None:
        kernel = _affine_relu_kernel
        operands = (params, x3)
        in_specs = [smem_spec, x_spec]
        x_operand_idx = 1
    else:
        # ---- Pass 1: per-batch sums (reduction over row tiles). ------------
        # With batch == 1 split the reduction range in two parallel chunks so
        # both v7x TensorCores stream (harmless serial loop of 2 on v5e/v6e).
        n_splits = 2 if (batch == 1 and n_tiles >= 2) else 1
        tiles_per_split = pl.cdiv(n_tiles, n_splits)
        exact_split = (n_splits * tiles_per_split == n_tiles)
        needs_mask = (n != n_tiles * tile_rows * LANES) or (not exact_split)

        if exact_split:
            x_sum_map = lambda b, c, t: (b, c * tiles_per_split + t, 0)
        else:
            # Clamp the (at most one) overflowing tile; its contribution is
            # fully masked out inside the kernel (flat index >= n).
            x_sum_map = lambda b, c, t: (
                b, jnp.minimum(c * tiles_per_split + t, n_tiles - 1), 0)

        sums = pl.pallas_call(
            functools.partial(_affine_relu_sum_kernel, n_valid=n,
                              tiles_per_split=tiles_per_split,
                              tile_rows=tile_rows, needs_mask=needs_mask),
            out_shape=jax.ShapeDtypeStruct((batch * n_splits, 1, LANES),
                                           jnp.float32),
            grid_spec=pl.GridSpec(
                grid=(batch, n_splits, tiles_per_split),
                in_specs=[smem_spec,
                          pl.BlockSpec((1, tile_rows, LANES), x_sum_map)],
                out_specs=pl.BlockSpec(
                    (1, 1, LANES), lambda b, c, t: (b * n_splits + c, 0, 0)),
            ),
            compiler_params=pltpu.CompilerParams(
                dimension_semantics=("parallel", "parallel", "arbitrary"),
                vmem_limit_bytes=_VMEM_LIMIT_BYTES),
        )(params, x3)

        per_batch_sum = jnp.maximum(sums.reshape(batch, -1).sum(axis=1), 1e-6)
        count_f = jnp.asarray(count, jnp.float32).reshape(-1)
        factor = (count_f / per_batch_sum).astype(jnp.float32)   # (batch,)

        kernel = _affine_relu_scale_kernel
        operands = (params, factor, x3)
        in_specs = [smem_spec, smem_spec, x_spec]
        x_operand_idx = 2

    # ---- Pass 2 (or the only pass): elementwise affine + relu [+ scale]. ---
    out3 = pl.pallas_call(
        kernel,
        out_shape=jax.ShapeDtypeStruct((batch, rows, LANES), orig_dtype),
        grid_spec=pl.GridSpec(
            grid=(batch, n_tiles),
            in_specs=in_specs,
            out_specs=x_spec,
        ),
        compiler_params=pltpu.CompilerParams(
            dimension_semantics=("parallel", "parallel"),
            vmem_limit_bytes=_VMEM_LIMIT_BYTES),
        input_output_aliases=({x_operand_idx: 0} if donate_input else {}),
    )(*operands)

    out = out3.reshape(batch, n_pad)
    if n_pad != n:
        out = out[:, :n]
    return out.reshape(orig_shape)


if __name__ == "__main__":
    key = jax.random.PRNGKey(0)
    k1, k2, k3 = jax.random.split(key, 3)

    density_scale = jnp.float32(1.5)
    density_shift = jnp.float32(0.1)

    def reference(x, count=None):
        y = jnp.maximum(x * density_scale + density_shift, 0.0)
        if count is None:
            return y
        s = jnp.maximum(y.sum(axis=tuple(range(1, y.ndim))), 1e-6)
        f = jnp.asarray(count, jnp.float32).reshape(-1) / s
        return y * f.reshape((-1,) + (1,) * (y.ndim - 1))

    # Case 1: aligned shape (n = 1024), with and without count.
    x = jax.random.normal(k1, (2, 4, 16, 16), dtype=jnp.float32)
    count = jnp.array([[37.0], [12.5]], dtype=jnp.float32)
    y1 = multi_scale_processor(x, density_scale, density_shift)
    y2 = multi_scale_processor(x, density_scale, density_shift, count=count)

    # Case 2: batch=1 with several row tiles (exercises the v7x reduction
    # split, the clamped duplicate tile and the ragged edge row-tile).
    xb = jax.random.normal(k2, (1, 1, 17, 128), dtype=jnp.float32)
    cb = jnp.array([[23.0]], dtype=jnp.float32)
    y3 = multi_scale_processor(xb, density_scale, density_shift, count=cb,
                               max_tile_rows=8)

    # Case 3: n not a multiple of 128 (padded fallback path).
    xc = jax.random.normal(k3, (2, 3, 5, 7), dtype=jnp.float32)
    cc = jnp.array([[4.0], [9.0]], dtype=jnp.float32)
    y4 = multi_scale_processor(xc, density_scale, density_shift, count=cc)
    y5 = multi_scale_processor(xc, density_scale, density_shift)

    jax.block_until_ready((y1, y2, y3, y4, y5))

    checks = [
        (y1, reference(x)),
        (y2, reference(x, count)),
        (y3, reference(xb, cb)),
        (y4, reference(xc, cc)),
        (y5, reference(xc)),
    ]
    for got, want in checks:
        assert got.shape == want.shape and got.dtype == want.dtype
        assert jnp.allclose(got, want, atol=1e-5, rtol=1e-5), float(
            jnp.max(jnp.abs(got - want)))

    print("KERNEL_OK")
</pallas_src>

<mosaic_0001>
module attributes {stable_mosaic.version = 11 : i64} {
  func.func @_affine_relu_kernel(%arg0: i32, %arg1: i32, %arg2: memref<2xf32, #tpu.memory_space<smem>>, %arg3: memref<1x8x128xf32, #tpu.memory_space<vmem>>, %arg4: memref<1x8x128xf32, #tpu.memory_space<vmem>>) attributes {dimension_semantics = [#tpu.dimension_semantics<parallel>, #tpu.dimension_semantics<parallel>], iteration_bounds = array<i64: 2, 1>, scalar_prefetch = 0 : i64, scratch_operands = 0 : i64, tpu.core_type = #tpu.core_type<tc>, window_params = [{transform_indices = @transform_0, window_bounds = array<i64: 2>}, {transform_indices = @transform_1, window_bounds = array<i64: 1, 8, 128>}, {transform_indices = @transform_2, window_bounds = array<i64: 1, 8, 128>}]} {
    %c0 = arith.constant 0 : index
    %c0_0 = arith.constant 0 : index
    %c0_1 = arith.constant 0 : index
    %0 = vector.load %arg3[%c0, %c0_0, %c0_1] : memref<1x8x128xf32, #tpu.memory_space<vmem>>, vector<1x8x128xf32>
    %c0_2 = arith.constant 0 : index
    %1 = memref.load %arg2[%c0_2] : memref<2xf32, #tpu.memory_space<smem>>
    %2 = vector.broadcast %1 : f32 to vector<1x8x128xf32>
    %3 = arith.mulf %0, %2 : vector<1x8x128xf32>
    %c1 = arith.constant 1 : index
    %4 = memref.load %arg2[%c1] : memref<2xf32, #tpu.memory_space<smem>>
    %5 = vector.broadcast %4 : f32 to vector<1x8x128xf32>
    %6 = arith.addf %3, %5 : vector<1x8x128xf32>
    %cst = arith.constant 0.000000e+00 : f32
    %7 = vector.broadcast %cst : f32 to vector<1x8x128xf32>
    %8 = arith.maximumf %6, %7 : vector<1x8x128xf32>
    %c0_3 = arith.constant 0 : index
    %c0_4 = arith.constant 0 : index
    %c0_5 = arith.constant 0 : index
    %9 = vector.load %arg4[%c0_3, %c0_4, %c0_5] : memref<1x8x128xf32, #tpu.memory_space<vmem>>, vector<1x8x128xf32>
    tpu.vector_store %arg4[%c0_3, %c0_4, %c0_5], %8 {strides = array<i32>} : memref<1x8x128xf32, #tpu.memory_space<vmem>>, vector<1x8x128xf32>,
    return
  }
  func.func @transform_0(%arg0: i32, %arg1: i32) -> i32 {
    %c0_i32 = arith.constant 0 : i32
    %c0_i32_0 = arith.constant 0 : i32
    return %c0_i32 : i32
  }
  func.func @transform_1(%arg0: i32, %arg1: i32) -> (i32, i32, i32) {
    %c0_i32 = arith.constant 0 : i32
    %c0_i32_0 = arith.constant 0 : i32
    return %arg0, %arg1, %c0_i32 : i32, i32, i32
  }
  func.func @transform_2(%arg0: i32, %arg1: i32) -> (i32, i32, i32) {
    %c0_i32 = arith.constant 0 : i32
    %c0_i32_0 = arith.constant 0 : i32
    return %arg0, %arg1, %c0_i32 : i32, i32, i32
  }
}

</mosaic_0001>

<llo_original>
// kernel: tpu_custom_call.1
$region0: #{tpu_custom_call.1}
  #allocation0 [shape = 'u32[]', space=smem, size = 0x4, offset = 0x4, fixed_abs, tag = 'smem constant byte address 0x4 - core index']
  #allocation1 [shape = 'u32[144,128]{1,0:T(1,128)}', space=vmem, size = 0x12000, scoped, tag = 'internal scratch']
  %s0 = inlined_call_operand.hbm [shape: f32[2], index: 0, kind: input, shape index: {}]
  %s1 = inlined_call_operand.hbm [shape: f32[2,8,128], index: 1, kind: input, shape index: {}]
  %s2 = inlined_call_operand.hbm [shape: f32[2,8,128], index: 2, kind: output, shape index: {}]
  %s3 = sld [smem:[#allocation0]]
  $region49: #{tpu_custom_call.1} parent=0
    _
  %s5 = ssub.s32 1, %s3
  %s6 = scalar_select 0, %s5, %s3
  $region1: #{tpu_custom_call.1} parent=0
    #allocation2 [shape = 'u8[512]{0}', space=smem, size = 0x200, scoped, tag = 'input window, operand 0, single buffered']
    #allocation3 [shape = 's32[2]{0}', space=sflag, size = 0x8, scoped, tag = 'scoped memory for tpu_custom_call.1']
    #allocation4 [shape = 's32[2]{0}', space=sflag, size = 0x8, scoped, tag = 'scoped memory for tpu_custom_call.1']
    #allocation5 [shape = 's32[2]{0}', space=sflag, size = 0x8, scoped, tag = 'scoped memory for tpu_custom_call.1']
    #allocation6 [shape = 'u8[8192]{0}', space=vmem, size = 0x2000, scoped, tag = 'input window, operand 1']
    #allocation7 [shape = 'u8[8192]{0}', space=vmem, size = 0x2000, scoped, tag = 'output window, operand 0']
    %7 = vsyncpa [#allocation5], 0
    %8 = vsyncpa [#allocation3], 0
    %s9 = scalar_lea.sflag [#allocation3], 1
    %10 = vsyncpa %s9, 0
    %11 = vsyncpa [#allocation4], 0
    %s12 = scalar_lea.sflag [#allocation4], 1
    %13 = vsyncpa %s12, 0
    loop: start=0, step=1, limit=4
    $region2: #{tpu_custom_call.1} parent=1 // loop_pre_header
      _
    $region3: #{tpu_custom_call.1} parent=1 // loop_header
      %s15 = sphi 0, %s19
      %p16 = scmp.ge.s32.totalorder %s15, 4
      %s22 = sphi 0, %s34
      %s23 = sphi 0, %s30
      %s24 = sphi 0, %s22
      %s25 = sphi 0, %s23
      %s26 = sphi 0, %s24
      %s27 = sphi 0, %s25
      %s35 = sphi 0, %s35
      %s37 = sphi 0, %s35
      %s38 = sphi 0, %s37
      %s52 = sphi 0, %s38
      %s60 = sphi 0, %s62
      %s63 = sphi 0, %s60
      %s64 = sphi 0, %s63
      %s80 = sphi 0, %s64
      %s88 = sphi 0, %s90
      %s91 = sphi 0, %s88
      %s92 = sphi 0, %s91
      %s108 = sphi 0, %s92
    $region4: #{tpu_custom_call.1} parent=1 // loop_header_branch
      %18 = sbr.rel (%p16) target = $region8
    $region5: #{tpu_custom_call.1} parent=1 // loop_body
      %s20 = ssub.s32 %s15, 1
      %s21 = ssub.s32 %s15, 2
      %s28 = sadd.s32 1, %s23
      %p29 = scmp.ge.s32.totalorder %s28, 1
      %s30 = scalar_select %p29, 0, %s28
      %s31 = sadd.s32 1, %s22
      %s32 = scalar_select %p29, %s31, %s22
      %p33 = scmp.ge.s32.totalorder %s32, 2
      %s34 = scalar_select %p33, 0, %s32
      %s36 = sadd.s32 %s35, 1
      %p39 = scmp.eq.s32.totalorder %s15, 1
      %p40 = scmp.ne.s32.totalorder %s35, %s37
      %p41 = scmp.eq.s32.totalorder %s15, 0
      %p42 = por %p40, %p41
      %p43 = scmp.ne.s32.totalorder %s35, %s37
      %p44 = scmp.eq.s32.totalorder %s20, 1
      %p45 = por %p43, %p44
      %p46 = scmp.ne.s32.totalorder %s37, %s38
      %p47 = scmp.eq.s32.totalorder %s20, 0
      %p48 = por %p46, %p47
      %p49 = scmp.ne.s32.totalorder %s37, %s38
      %p50 = scmp.eq.s32.totalorder %s21, 1
      %p51 = por %p49, %p50
      %p53 = scmp.ne.s32.totalorder %s38, %s52
      %p54 = scmp.eq.s32.totalorder %s21, 0
      %p55 = por %p53, %p54
      %s56 = ssub.s32 %s22, %s34
      %s57 = ssub.s32 %s23, %s30
      %s58 = sor.u32 %s56, %s57
      %p59 = scmp.eq.s32.totalorder %s58, 0
      %s61 = sadd.s32 %s60, 1
      %s62 = scalar_select %p59, %s60, %s61
      %p65 = pneg %p59
      %p66 = scmp.eq.s32.totalorder %s15, 1
      %p67 = por %p65, %p66
      %p68 = scmp.ne.s32.totalorder %s60, %s63
      %p69 = scmp.eq.s32.totalorder %s15, 0
      %p70 = por %p68, %p69
      %p71 = scmp.ne.s32.totalorder %s60, %s63
      %p72 = scmp.eq.s32.totalorder %s20, 1
      %p73 = por %p71, %p72
      %p74 = scmp.ne.s32.totalorder %s63, %s64
      %p75 = scmp.eq.s32.totalorder %s20, 0
      %p76 = por %p74, %p75
      %p77 = scmp.ne.s32.totalorder %s63, %s64
      %p78 = scmp.eq.s32.totalorder %s21, 1
      %p79 = por %p77, %p78
      %p81 = scmp.ne.s32.totalorder %s64, %s80
      %p82 = scmp.eq.s32.totalorder %s21, 0
      %p83 = por %p81, %p82
      %s84 = ssub.s32 %s22, %s34
      %s85 = ssub.s32 %s23, %s30
      %s86 = sor.u32 %s84, %s85
      %p87 = scmp.eq.s32.totalorder %s86, 0
      %s89 = sadd.s32 %s88, 1
      %s90 = scalar_select %p87, %s88, %s89
      %p93 = pneg %p87
      %p94 = scmp.eq.s32.totalorder %s15, 1
      %p95 = por %p93, %p94
      %p96 = scmp.ne.s32.totalorder %s88, %s91
      %p97 = scmp.eq.s32.totalorder %s15, 0
      %p98 = por %p96, %p97
      %p99 = scmp.ne.s32.totalorder %s88, %s91
      %p100 = scmp.eq.s32.totalorder %s20, 1
      %p101 = por %p99, %p100
      %p102 = scmp.ne.s32.totalorder %s91, %s92
      %p103 = scmp.eq.s32.totalorder %s20, 0
      %p104 = por %p102, %p103
      %p105 = scmp.ne.s32.totalorder %s91, %s92
      %p106 = scmp.eq.s32.totalorder %s21, 1
      %p107 = por %p105, %p106
      %p109 = scmp.ne.s32.totalorder %s92, %s108
      %p110 = scmp.eq.s32.totalorder %s21, 0
      %p111 = por %p109, %p110
      %p112 = scmp.le.s32.totalorder 1, %s15
      %p113 = scmp.lt.s32.totalorder %s15, 3
      %p114 = pnand %p112, %p113
      %p115 = pneg %p114
      // Predicated region
      $region9: #{tpu_custom_call.1} parent=5 // pred_check
        _
      $region10: #{tpu_custom_call.1} parent=5 // pred_check_branch
        %117 = sbr.rel (%p114) target = $region12
      $region11: #{tpu_custom_call.1} parent=5 // pred_region
        %s118 = ssub.s32 %s15, 1
        // Predicated region
        $region13: #{tpu_custom_call.1} parent=11 // pred_check
          %p119 = pneg %p48
        $region14: #{tpu_custom_call.1} parent=11 // pred_check_branch
          %121 = sbr.rel (%p119) target = $region16
        $region15: #{tpu_custom_call.1} parent=11 // pred_region
          %s123 = ssub.s32 16, 16
          %124 = vsyncadd [#allocation5], %s123
          %127 = dma.hbm_to_smem %s0, 16, [#allocation2], [#allocation5]
        $region16: #{tpu_custom_call.1} parent=11 // pred_fallthru
          _
      $region12: #{tpu_custom_call.1} parent=5 // pred_fallthru
        _
      %p128 = scmp.lt.s32.totalorder %s15, 2
      // Predicated region
      $region17: #{tpu_custom_call.1} parent=5 // pred_check
        %p129 = pneg %p128
      $region18: #{tpu_custom_call.1} parent=5 // pred_check_branch
        %131 = sbr.rel (%p129) target = $region20
      $region19: #{tpu_custom_call.1} parent=5 // pred_region
        // Predicated region
        $region21: #{tpu_custom_call.1} parent=19 // pred_check
          %p132 = pneg %p70
        $region22: #{tpu_custom_call.1} parent=19 // pred_check_branch
          %134 = sbr.rel (%p132) target = $region24
        $region23: #{tpu_custom_call.1} parent=19 // pred_region
          %s135 = sand.u32 %s60, 1
          %s136 = scalar_lea.sflag [#allocation3], %s135
          %s137 = sand.u32 %s60, 1
          %s138 = smul.addr %s137, 8
          %s139 = scalar_lea.vmem [#allocation6], %s138
          %s141 = ssub.s32 128, 128
          %142 = vsyncadd %s136, %s141
          %s143 = sadd.s32 %s23, %s22
          %s144 = smul.addr %s143, 128
          %s145 = scalar_lea.hbm %s1, %s144
          %s147 = sshll.u32 %s139, 4
          %s148 = int_to_ptr.vmem [resolvable:$true] %s147
          %150 = dma.hbm_to_vmem [thread:$0]  %s145, 128, %s148, %s136
        $region24: #{tpu_custom_call.1} parent=19 // pred_fallthru
          _
      $region20: #{tpu_custom_call.1} parent=5 // pred_fallthru
        _
      %p151 = scmp.le.s32.totalorder 1, %s15
      %p152 = scmp.lt.s32.totalorder %s15, 3
      %p153 = pnand %p151, %p152
      %p154 = pneg %p153
      // Predicated region
      $region25: #{tpu_custom_call.1} parent=5 // pred_check
        _
      $region26: #{tpu_custom_call.1} parent=5 // pred_check_branch
        %156 = sbr.rel (%p153) target = $region28
      $region27: #{tpu_custom_call.1} parent=5 // pred_region
        %s157 = ssub.s32 %s15, 1
        // Predicated region
        $region29: #{tpu_custom_call.1} parent=27 // pred_check
          %p158 = pneg %p48
        $region30: #{tpu_custom_call.1} parent=27 // pred_check_branch
          %160 = sbr.rel (%p158) target = $region32
        $region31: #{tpu_custom_call.1} parent=27 // pred_region
          %161 = dma.done [#allocation5], 16
        $region32: #{tpu_custom_call.1} parent=27 // pred_fallthru
          _
        %s162 = sand.u32 %s63, 1
        %s163 = scalar_lea.sflag [#allocation3], %s162
        %s164 = sand.u32 %s63, 1
        %s165 = smul.addr %s164, 8
        %s166 = scalar_lea.vmem [#allocation6], %s165
        // Predicated region
        $region33: #{tpu_custom_call.1} parent=27 // pred_check
          %p167 = pneg %p76
        $region34: #{tpu_custom_call.1} parent=27 // pred_check_branch
          %169 = sbr.rel (%p167) target = $region36
        $region35: #{tpu_custom_call.1} parent=27 // pred_region
          %170 = dma.done %s163, 128
        $region36: #{tpu_custom_call.1} parent=27 // pred_fallthru
          _
        %171 = sfence
        %p172 = pneg %p48
        %p173 = pneg %p45
        %s174 = sand.u32 %s63, 1
        %s175 = scalar_lea.sflag [#allocation3], %s174
        %s176 = sand.u32 %s63, 1
        %s177 = smul.addr %s176, 8
        %s178 = scalar_lea.vmem [#allocation6], %s177
        %p179 = pneg %p76
        %p180 = pneg %p73
        %p181 = pneg %p104
        %p182 = pneg %p101
        %s183 = sand.u32 %s91, 1
        %s184 = scalar_lea.sflag [#allocation4], %s183
        %s185 = sand.u32 %s91, 1
        %s186 = smul.addr %s185, 8
        %s187 = scalar_lea.vmem [#allocation7], %s186
        %v188 = vld [vmem:[%s166] sm:$0xff]
        %s189 = sld [smem:[#allocation2]]
        %v190 = vstv %s189
        %v191 = vmul.f32 %v188, %v190
        %s192 = sld [smem:[#allocation2 + $0x1]]
        %v193 = vstv %s192
        %v194 = vadd.f32 %v191, %v193
        %v195 = vmax.f32 %v194, 0.0
        %196 = vst [vmem:[%s187] sm:$0xff] %v195
        %s197 = sand.u32 %s91, 1
        %s198 = scalar_lea.sflag [#allocation4], %s197
        %s199 = sand.u32 %s91, 1
        %s200 = smul.addr %s199, 8
        %s201 = scalar_lea.vmem [#allocation7], %s200
        // Predicated region
        $region37: #{tpu_custom_call.1} parent=27 // pred_check
          %p202 = pneg %p101
        $region38: #{tpu_custom_call.1} parent=27 // pred_check_branch
          %204 = sbr.rel (%p202) target = $region40
        $region39: #{tpu_custom_call.1} parent=27 // pred_region
          %s206 = ssub.s32 128, 128
          %207 = vsyncadd %s198, %s206
          %s208 = sadd.s32 %s25, %s24
          %s209 = smul.addr %s208, 128
          %s210 = scalar_lea.hbm %s2, %s209
          %s212 = sshll.u32 %s201, 4
          %s213 = int_to_ptr.vmem [resolvable:$true] %s212
          %215 = dma.vmem_to_hbm [thread:$0]  %s213, 128, %s210, %s198
        $region40: #{tpu_custom_call.1} parent=27 // pred_fallthru
          _
      $region28: #{tpu_custom_call.1} parent=5 // pred_fallthru
        _
      %p216 = scmp.le.s32.totalorder 2, %s15
      // Predicated region
      $region41: #{tpu_custom_call.1} parent=5 // pred_check
        %p217 = pneg %p216
      $region42: #{tpu_custom_call.1} parent=5 // pred_check_branch
        %219 = sbr.rel (%p217) target = $region44
      $region43: #{tpu_custom_call.1} parent=5 // pred_region
        %s220 = ssub.s32 %s15, 2
        // Predicated region
        $region45: #{tpu_custom_call.1} parent=43 // pred_check
          %p221 = pneg %p107
        $region46: #{tpu_custom_call.1} parent=43 // pred_check_branch
          %223 = sbr.rel (%p221) target = $region48
        $region47: #{tpu_custom_call.1} parent=43 // pred_region
          %s224 = sand.u32 %s92, 1
          %s225 = scalar_lea.sflag [#allocation4], %s224
          %s226 = sand.u32 %s92, 1
          %s227 = smul.addr %s226, 8
          %s228 = scalar_lea.vmem [#allocation7], %s227
          %229 = dma.done %s225, 128
        $region48: #{tpu_custom_call.1} parent=43 // pred_fallthru
          _
      $region44: #{tpu_custom_call.1} parent=5 // pred_fallthru
        _
    $region6: #{tpu_custom_call.1} parent=1 // loop_footer
      %s19 = sadd.s32 1, %s15
    $region7: #{tpu_custom_call.1} parent=1 // loop_footer_branch
      %14 = sbr.rel target = $region3
    $region8: #{tpu_custom_call.1} parent=1 // loop_exit
      _
    %230 = vsyncpa [#allocation3], 1
    %s231 = scalar_lea.sflag [#allocation3], 1
    %232 = vsyncpa %s231, 1
    %233 = vsyncpa [#allocation4], 1
    %s234 = scalar_lea.sflag [#allocation4], 1
    %235 = vsyncpa %s234, 1
    %236 = vsyncpa [#allocation5], 1
    %s237 = scalar_lea.sflag [#allocation5], 1
    %238 = vsyncpa %s237, 1

</llo_original>
